<compile_context>
chip_gen: v5e
topology: v5e:2x2
jax: 0.10.0
libtpu: 0.0.40
codegen_flags: <defaults>
</compile_context>

<pallas_src>
import math
import functools

import jax
import jax.numpy as jnp
from jax import lax
from jax.experimental import pallas as pl
from jax.experimental.pallas import tpu as pltpu


def _round_up(x, m):
    return (x + m - 1) // m * m


def _encoder_kernel(ids_ref, emb_ref, pe_ref, out_ref, *, scale):
    # ids_ref: (TM, 1) int32 token ids for this block of flattened (seq*batch) rows.
    # emb_ref: (ntoken, ninp) f32 embedding table, VMEM-resident across all steps.
    # pe_ref:  (TM, ninp) f32 positional-encoding rows, pre-broadcast to row order.
    # out_ref: (TM, ninp) f32 output tile.
    tm = ids_ref.shape[0]
    ntoken = emb_ref.shape[0]

    ids = ids_ref[...]                                             # (TM, 1) int32
    # One-hot gather on the MXU: (TM, ntoken) @ (ntoken, ninp) -> (TM, ninp).
    tok_oh = (ids == lax.broadcasted_iota(jnp.int32, (tm, ntoken), 1)
              ).astype(emb_ref.dtype)
    emb = jnp.dot(tok_oh, emb_ref[...], preferred_element_type=jnp.float32)

    out_ref[...] = (emb * scale + pe_ref[...]).astype(out_ref.dtype)


def encoder_forward(src, emb_weight, pe, *, ninp, block_rows=512):
    """src: (batch, seq) int32; emb_weight: (ntoken, ninp) f32; pe: (>=seq, ninp) f32.

    Returns (seq, batch, ninp) f32: embedding(src).T-major * sqrt(ninp) + pe[:seq],
    matching the PyTorch seq-first encoder output (dropout = identity, eval mode).
    """
    batch, seq = src.shape
    n_rows = seq * batch
    ntoken = emb_weight.shape[0]
    scale = float(math.sqrt(ninp))

    # Block TM rows per grid step; keep TM a multiple of 8 (full sublanes per store).
    tm = min(block_rows, _round_up(n_rows, 8))
    padded_rows = _round_up(n_rows, tm)
    pad = padded_rows - n_rows

    # Flat row n corresponds to (s, b) = (n // batch, n % batch)  (seq-first output).
    ids = src.T.reshape(n_rows, 1).astype(jnp.int32)
    # Pre-broadcast pe[:seq] to (seq*batch, ninp) row order so it tiles like the output.
    pe_rows = jnp.repeat(pe[:seq].astype(emb_weight.dtype), batch, axis=0)
    if pad:
        ids = jnp.pad(ids, ((0, pad), (0, 0)))          # id 0: valid row, sliced off below
        pe_rows = jnp.pad(pe_rows, ((0, pad), (0, 0)))

    kernel = functools.partial(_encoder_kernel, scale=scale)

    out = pl.pallas_call(
        kernel,
        out_shape=jax.ShapeDtypeStruct((padded_rows, ninp), emb_weight.dtype),
        grid=(padded_rows // tm,),
        in_specs=[
            # token ids for this block of rows
            pl.BlockSpec((tm, 1), lambda i: (i, 0)),
            # whole embedding table, VMEM-resident (constant block index -> DMA'd once)
            pl.BlockSpec((ntoken, ninp), lambda i: (0, 0)),
            # positional-encoding rows, streamed with the same tiling as the output
            pl.BlockSpec((tm, ninp), lambda i: (i, 0)),
        ],
        out_specs=pl.BlockSpec((tm, ninp), lambda i: (i, 0)),
        compiler_params=pltpu.CompilerParams(
            dimension_semantics=("parallel",)),
    )(ids, emb_weight, pe_rows)

    if pad:
        out = out[:n_rows]
    return out.reshape(seq, batch, ninp)


def make_positional_encoding(max_len, d_model):
    """Same construction as the PyTorch PositionalEncoding buffer (before the
    unsqueeze/transpose, i.e. shape (max_len, d_model))."""
    position = jnp.arange(max_len, dtype=jnp.float32)[:, None]
    div_term = jnp.exp(
        jnp.arange(0, d_model, 2, dtype=jnp.float32) * (-math.log(10000.0) / d_model)
    )
    pe = jnp.zeros((max_len, d_model), jnp.float32)
    pe = pe.at[:, 0::2].set(jnp.sin(position * div_term))
    pe = pe.at[:, 1::2].set(jnp.cos(position * div_term))
    return pe


if __name__ == "__main__":
    ntoken, ninp = 40, 32
    batch, seq = 2, 8

    key = jax.random.PRNGKey(0)
    k_emb, k_src = jax.random.split(key)

    # nn.Embedding weight init: uniform(-0.1, 0.1), deterministic here.
    emb_weight = jax.random.uniform(
        k_emb, (ntoken, ninp), dtype=jnp.float32, minval=-0.1, maxval=0.1
    )
    src = jax.random.randint(k_src, (batch, seq), 0, ntoken, dtype=jnp.int32)

    pe = make_positional_encoding(5000, ninp)

    out = encoder_forward(src, emb_weight, pe, ninp=ninp)
    out = jax.block_until_ready(out)

    # Pure-JAX reference of the PyTorch forward (eval mode).
    ref = jnp.take(emb_weight, src.T, axis=0) * math.sqrt(ninp) + pe[:seq, None, :]

    assert out.shape == (seq, batch, ninp), out.shape
    assert jnp.allclose(out, ref, atol=1e-3, rtol=1e-3), float(
        jnp.max(jnp.abs(out - ref))
    )

    print("KERNEL_OK")
</pallas_src>

<mosaic_0001>
module attributes {stable_mosaic.version = 11 : i64} {
  func.func @_encoder_kernel(%arg0: i32, %arg1: memref<16x1xi32, #tpu.memory_space<vmem>>, %arg2: memref<40x32xf32, #tpu.memory_space<vmem>>, %arg3: memref<16x32xf32, #tpu.memory_space<vmem>>, %arg4: memref<16x32xf32, #tpu.memory_space<vmem>>) attributes {dimension_semantics = [#tpu.dimension_semantics<parallel>], iteration_bounds = array<i64: 1>, scalar_prefetch = 0 : i64, scratch_operands = 0 : i64, tpu.core_type = #tpu.core_type<tc>, window_params = [{transform_indices = @transform_0, window_bounds = array<i64: 16, 1>}, {pipeline_mode = #tpu.pipeline_mode<synchronous>, transform_indices = @transform_1, window_bounds = array<i64: 40, 32>}, {transform_indices = @transform_2, window_bounds = array<i64: 16, 32>}, {transform_indices = @transform_3, window_bounds = array<i64: 16, 32>}]} {
    %c0 = arith.constant 0 : index
    %c0_0 = arith.constant 0 : index
    %0 = vector.load %arg1[%c0, %c0_0] : memref<16x1xi32, #tpu.memory_space<vmem>>, vector<16x1xi32>
    %1 = tpu.iota {dimensions = array<i32: 1>} : vector<16x40xi32>
    %2 = vector.broadcast %0 : vector<16x1xi32> to vector<16x40xi32>
    %3 = arith.cmpi eq, %2, %1 : vector<16x40xi32>
    %4 = arith.extui %3 : vector<16x40xi1> to vector<16x40xi32>
    %5 = arith.sitofp %4 : vector<16x40xi32> to vector<16x40xf32>
    %c0_1 = arith.constant 0 : index
    %c0_2 = arith.constant 0 : index
    %6 = vector.load %arg2[%c0_1, %c0_2] : memref<40x32xf32, #tpu.memory_space<vmem>>, vector<40x32xf32>
    %cst = arith.constant dense<0.000000e+00> : vector<16x32xf32>
    %7 = tpu.matmul %5, %6, %cst {dimension_numbers = #tpu.dot_dimension_numbers<[1], [0], [0], [1], [0, 0, 1, 1], [], []>} : vector<16x40xf32>, vector<40x32xf32>, vector<16x32xf32> -> vector<16x32xf32>
    %cst_3 = arith.constant 5.65685415 : f32
    %8 = vector.broadcast %cst_3 : f32 to vector<16x32xf32>
    %9 = arith.mulf %7, %8 : vector<16x32xf32>
    %c0_4 = arith.constant 0 : index
    %c0_5 = arith.constant 0 : index
    %10 = vector.load %arg3[%c0_4, %c0_5] : memref<16x32xf32, #tpu.memory_space<vmem>>, vector<16x32xf32>
    %11 = arith.addf %9, %10 : vector<16x32xf32>
    %c0_6 = arith.constant 0 : index
    %c0_7 = arith.constant 0 : index
    %12 = vector.load %arg4[%c0_6, %c0_7] : memref<16x32xf32, #tpu.memory_space<vmem>>, vector<16x32xf32>
    tpu.vector_store %arg4[%c0_6, %c0_7], %11 {strides = array<i32>} : memref<16x32xf32, #tpu.memory_space<vmem>>, vector<16x32xf32>,
    return
  }
  func.func @transform_0(%arg0: i32) -> (i32, i32) {
    %c0_i32 = arith.constant 0 : i32
    %c0_i32_0 = arith.constant 0 : i32
    return %arg0, %c0_i32 : i32, i32
  }
  func.func @transform_1(%arg0: i32) -> (i32, i32) {
    %c0_i32 = arith.constant 0 : i32
    %c0_i32_0 = arith.constant 0 : i32
    %c0_i32_1 = arith.constant 0 : i32
    return %c0_i32, %c0_i32_0 : i32, i32
  }
  func.func @transform_2(%arg0: i32) -> (i32, i32) {
    %c0_i32 = arith.constant 0 : i32
    %c0_i32_0 = arith.constant 0 : i32
    return %arg0, %c0_i32 : i32, i32
  }
  func.func @transform_3(%arg0: i32) -> (i32, i32) {
    %c0_i32 = arith.constant 0 : i32
    %c0_i32_0 = arith.constant 0 : i32
    return %arg0, %c0_i32 : i32, i32
  }
}

</mosaic_0001>

<llo_original>
// kernel: tpu_custom_call.1
$region0: #{tpu_custom_call.1}
  #allocation0 [shape = 'u32[]', space=smem, size = 0x4, offset = 0x4, fixed_abs, tag = 'smem constant byte address 0x4 - core index']
  #allocation1 [shape = 'u32[72,128]{1,0:T(1,128)}', space=vmem, size = 0x9000, scoped, tag = 'internal scratch']
  %s0 = inlined_call_operand.vmem [shape: s32[16,1], index: 0, kind: input, shape index: {}]
  %s1 = inlined_call_operand.vmem [shape: f32[40,32], index: 1, kind: input, shape index: {}]
  %s2 = inlined_call_operand.vmem [shape: f32[16,32], index: 2, kind: input, shape index: {}]
  %s3 = inlined_call_operand.hbm [shape: f32[16,32], index: 3, kind: output, shape index: {}]
  %s4 = sld [smem:[#allocation0]]
  $region22: #{tpu_custom_call.1} parent=0
    _
  %s6 = ssub.s32 1, %s4
  %s7 = scalar_select 0, %s6, %s4
  $region1: #{tpu_custom_call.1} parent=0
    #allocation2 [shape = 'u8[8192]{0}', space=vmem, size = 0x2000, scoped, tag = 'output window, operand 0, single buffered']
    #allocation3 [shape = 's32[1]{0}', space=sflag, size = 0x4, scoped, tag = 'scoped memory for tpu_custom_call.1']
    %8 = vsyncpa [#allocation3], 0
    // Predicated region
    $region2: #{tpu_custom_call.1} parent=1 // pred_check
      _
    $region3: #{tpu_custom_call.1} parent=1 // pred_check_branch
      %10 = sbr.rel (0) target = $region5
    $region4: #{tpu_custom_call.1} parent=1 // pred_region
      _
    $region5: #{tpu_custom_call.1} parent=1 // pred_fallthru
      _
    // Predicated region
    $region6: #{tpu_custom_call.1} parent=1 // pred_check
      _
    $region7: #{tpu_custom_call.1} parent=1 // pred_check_branch
      %12 = sbr.rel (0) target = $region9
    $region8: #{tpu_custom_call.1} parent=1 // pred_region
      _
    $region9: #{tpu_custom_call.1} parent=1 // pred_fallthru
      _
    // Predicated region
    $region10: #{tpu_custom_call.1} parent=1 // pred_check
      _
    $region11: #{tpu_custom_call.1} parent=1 // pred_check_branch
      %14 = sbr.rel (0) target = $region13
    $region12: #{tpu_custom_call.1} parent=1 // pred_region
      _
    $region13: #{tpu_custom_call.1} parent=1 // pred_fallthru
      _
    %v15 = vld [vmem:[%s0] sm:$0xff]
    %v16 = vld [vmem:[%s0 + $0x8] sm:$0xff]
    %v17 = vlaneseq
    %v18 = vand.u32 %v17, 127
    %19 = vset.pattern.permute.xlu0 0
    %20 = vperm.xlu0 %19, %v15
    %v21 = vpop.permute.xlu0 %20
    %22 = vset.pattern.permute.xlu0 0
    %23 = vperm.xlu0 %22, %v16
    %v24 = vpop.permute.xlu0 %23
    %vm25 = vcmp.eq.s32.totalorder %v21, %v18
    %vm26 = vcmp.eq.s32.totalorder %v24, %v18
    %v27 = vsel %vm25, 1, 0
    %v28 = vsel %vm26, 1, 0
    %v29 = vcvt.s32.f32 %v27
    %v30 = vcvt.s32.f32 %v28
    %v31 = vld [vmem:[%s1] sm:$0xff]
    %v32 = vld [vmem:[%s1 + $0x8] sm:$0xff]
    %v33 = vld [vmem:[%s1 + $0x10] sm:$0xff]
    %v34 = vld [vmem:[%s1 + $0x18] sm:$0xff]
    %v35 = vld [vmem:[%s1 + $0x20] sm:$0xff]
    %vm36 = vcmask 326656
    %v38 = vsel %vm36, %v29, 0
    %v41 = vsel %vm36, %v30, 0
    %43 = vmatpush.msra.mxu0 0.0
    %44 = vmatpush.msra.mxu0 0.0
    %45 = vmatpush.msra.mxu0 0.0
    %46 = vmatpush.msra.mxu0 0.0
    %47 = vmatpush.msra.mxu0 0.0
    %48 = vmatpush.msra.mxu0 0.0
    %49 = vmatpush.msra.mxu0 0.0
    %50 = vmatpush.msra.mxu0 0.0
    %51 = vmatpush.msra.mxu0 0.0
    %52 = vmatpush.msra.mxu0 0.0
    %53 = vmatpush.msra.mxu0 0.0
    %54 = vmatpush.msra.mxu0 %v35
    %55 = vmatpush.msra.mxu0 %v34
    %56 = vmatpush.msra.mxu0 %v33
    %57 = vmatpush.msra.mxu0 %v32
    %58 = vmatpush.msra.mxu0 %v31
    %59 = vmatmul.f32.gmra.mxu0 %v38
    %v60 = vpop.f32.mrf.mxu0
    %v61 = vadd.f32 0.0, %v60
    %62 = vmatmul.f32.gmra.mxu0 %v41
    %v63 = vpop.f32.mrf.mxu0
    %v64 = vadd.f32 0.0, %v63
    %65 = vdwg.mxu0
    %v66 = vmul.f32 %v61, 5.656854
    %v67 = vmul.f32 %v64, 5.656854
    %v68 = vld [vmem:[%s2] sm:$0xff]
    %v69 = vld [vmem:[%s2 + $0x8] sm:$0xff]
    %v70 = vadd.f32 %v66, %v68
    %v71 = vadd.f32 %v67, %v69
    %vm72 = vcmask 261120
    %73 = vst.msk [vmem:[#allocation2] sm:$0xff] %vm72, %v70
    %74 = vst.msk [vmem:[#allocation2 + $0x8] sm:$0xff] %vm72, %v71
    // Predicated region
    $region14: #{tpu_custom_call.1} parent=1 // pred_check
      _
    $region15: #{tpu_custom_call.1} parent=1 // pred_check_branch
      %76 = sbr.rel (0) target = $region17
    $region16: #{tpu_custom_call.1} parent=1 // pred_region
      %78 = vsyncadd [#allocation3], 0
      %s79 = sshll.u32 [#allocation2], 4
      %s80 = int_to_ptr.vmem [resolvable:$true] %s79
      %s81 = sshll.u32 %s3, 4
      %s82 = int_to_ptr.hbm [resolvable:$true] %s81
      %87 = dma.vmem_to_hbm [thread:$0]  %s80, 256, %s82, [#allocation3], 128, 128, 8
    $region17: #{tpu_custom_call.1} parent=1 // pred_fallthru
      _
    // Predicated region
    $region18: #{tpu_custom_call.1} parent=1 // pred_check
      _
    $region19: #{tpu_custom_call.1} parent=1 // pred_check_branch
      %89 = sbr.rel (0) target = $region21
    $region20: #{tpu_custom_call.1} parent=1 // pred_region
      %91 = dma.done [#allocation3], 256
    $region21: #{tpu_custom_call.1} parent=1 // pred_fallthru
      _
    %92 = vsyncpa [#allocation3], 1

</llo_original>
